<compile_context>
chip_gen: v7x
topology: tpu7x:2x2x1
jax: 0.10.0
libtpu: 0.0.40
codegen_flags: <defaults>
</compile_context>

<pallas_src>
import math

import jax
import jax.numpy as jnp
from jax import lax
from jax.experimental import pallas as pl
from jax.experimental.pallas import tpu as pltpu


def _cdiv(a, b):
    return -(-a // b)


def _round_up(n, m):
    return _cdiv(n, m) * m


# ---------------------------------------------------------------------------
# Kernels
# ---------------------------------------------------------------------------
def _slr_kernel(beff_ref, x_ref, w_ref, o_ref):
    """Resident-weight path: out = x @ wn^T + beff (one MXU op + add per tile)."""
    acc = lax.dot_general(
        x_ref[...], w_ref[...],
        dimension_numbers=(((1,), (1,)), ((), ())),   # contract K of x:(tm,K) and w:(O,K)
        preferred_element_type=jnp.float32)
    o_ref[...] = (acc + beff_ref[...]).astype(o_ref.dtype)


def _slr_kernel_ksplit(beff_ref, x_ref, w_ref, o_ref, acc_ref):
    """K-tiled fallback (weight too large for VMEM, e.g. v7x): accumulate over k."""
    k = pl.program_id(1)

    @pl.when(k == 0)
    def _():
        acc_ref[...] = jnp.zeros_like(acc_ref)

    acc_ref[...] += lax.dot_general(
        x_ref[...], w_ref[...],
        dimension_numbers=(((1,), (1,)), ((), ())),
        preferred_element_type=jnp.float32)

    @pl.when(k == pl.num_programs(1) - 1)
    def _():
        o_ref[...] = (acc_ref[...] + beff_ref[...]).astype(o_ref.dtype)


# ---------------------------------------------------------------------------
# Tiling / VMEM planning
# ---------------------------------------------------------------------------
def _vmem_capacity_bytes():
    try:
        info = pltpu.get_tpu_info()
        cap = getattr(info, "vmem_capacity_bytes", None)
        if cap:
            return int(cap)
    except Exception:
        pass
    return 64 << 20  # conservative default (v7x-class)


def _plan(B, K, O, tile_m, out_itemsize, k_tile=None):
    o_pad = _round_up(O, 128)
    k_pad = _round_up(max(K, 1), 128)

    vmem_cap = _vmem_capacity_bytes()
    # v7x: 64 MiB physical VMEM -> stay well under the scoped default.
    # v5e/v6e: 128 MiB -> a larger scoped budget is fine.
    vmem_budget = (26 << 20) if vmem_cap <= (64 << 20) else (64 << 20)

    # Batch tile: >=2 tiles when possible (v7x has 2 TensorCores, grid axis is
    # "parallel") while minimizing batch padding (b_pad rounds up to tm).
    n_m = max(2, _cdiv(B, tile_m))
    tm = min(tile_m, max(8, _round_up(_cdiv(B, n_m), 8)))

    # K tile: keep the (o_pad, k_pad) bf16 weight fully VMEM-resident when it
    # fits in half the budget, else stream double-buffered K slabs.
    if k_tile is not None:
        tk = min(_round_up(k_tile, 128), k_pad)
    elif o_pad * k_pad * 2 <= vmem_budget // 2:
        tk = k_pad
    else:
        tk = max(128, ((vmem_budget // 2) // (4 * o_pad)) // 128 * 128)
        tk = min(tk, k_pad)
    k_pad = _round_up(k_pad, tk)

    def footprint(tm_):
        w_bytes = o_pad * tk * 2 * (1 if tk == k_pad else 2)   # resident vs streamed
        x_bytes = 2 * tm_ * tk * 2                             # double-buffered bf16
        out_bytes = 2 * tm_ * o_pad * out_itemsize
        acc_bytes = tm_ * o_pad * 4 if tk < k_pad else 0
        beff_bytes = 2 * o_pad * 4
        return w_bytes + x_bytes + out_bytes + acc_bytes + beff_bytes

    while footprint(tm) > vmem_budget and tm > 8:
        tm = max(8, _round_up(tm // 2, 8))

    b_pad = _round_up(B, tm)
    vmem_limit = int(min(max(2 * footprint(tm), 8 << 20), vmem_budget + (8 << 20)))
    return k_pad, o_pad, tm, tk, b_pad, vmem_limit


# ---------------------------------------------------------------------------
# Forward wrapper
# ---------------------------------------------------------------------------
def slr_forward(x, weight, bias, *, tile_m=512, k_tile=None, out_dtype=None,
                single_buffer_consts=True):
    """x: (B, in_features); weight: (out_features, in_features); bias: (out_features,)."""
    B, K = x.shape
    O, K2 = weight.shape
    assert K == K2 and bias.shape == (O,)
    out_dtype = x.dtype if out_dtype is None else out_dtype

    # ---- O(K + O) epilogue precompute, hoisted out of the grid loop ----------
    # r = ||input[0]||_2 from the *f32* first row (matches the PyTorch module).
    x0 = x[0].astype(jnp.float32)
    r = jnp.sqrt(jnp.sum(x0 * x0))
    beff = (r * jnp.tanh(bias.astype(jnp.float32)))[None, :]          # (1, O) f32

    # F.normalize(weight, dim=1) in f32; kept in (O, K) layout — no explicit
    # transpose pass, the kernel contracts K of both operands on the MXU.
    w_f32 = weight.astype(jnp.float32)
    norms = jnp.sqrt(jnp.sum(w_f32 * w_f32, axis=1, keepdims=True))
    wn = w_f32 / jnp.maximum(norms, 1e-12)                            # (O, K)

    k_pad, o_pad, tm, tk, b_pad, vmem_limit = _plan(
        B, K, O, tile_m, jnp.dtype(out_dtype).itemsize, k_tile)

    # Zero padding is exact for the contraction; extra rows/cols sliced off below.
    x_bf16 = jnp.pad(x.astype(jnp.bfloat16), ((0, b_pad - B), (0, k_pad - K)))
    w_bf16 = jnp.pad(wn.astype(jnp.bfloat16), ((0, o_pad - O), (0, k_pad - K)))
    beff_p = jnp.pad(beff, ((0, 0), (0, o_pad - O)))                  # tanh(0)=0 cols

    num_m = b_pad // tm
    num_k = k_pad // tk

    def run(use_single_buffer):
        # Grid-invariant operands: single-buffer them to halve their VMEM cost.
        const_pm = pl.Buffered(1) if use_single_buffer else None

        def const_spec(shape, index_map):
            if const_pm is None:
                return pl.BlockSpec(shape, index_map)
            return pl.BlockSpec(shape, index_map, pipeline_mode=const_pm)

        if num_k == 1:
            grid = (num_m,)
            in_specs = [
                const_spec((1, o_pad), lambda i: (0, 0)),      # beff row (resident)
                pl.BlockSpec((tm, k_pad), lambda i: (i, 0)),   # x batch tile (streamed)
                const_spec((o_pad, k_pad), lambda i: (0, 0)),  # wn (resident)
            ]
            out_specs = pl.BlockSpec((tm, o_pad), lambda i: (i, 0))
            kernel, scratch = _slr_kernel, ()
            semantics = ("parallel",)
        else:
            grid = (num_m, num_k)
            in_specs = [
                const_spec((1, o_pad), lambda i, k: (0, 0)),
                pl.BlockSpec((tm, tk), lambda i, k: (i, k)),
                pl.BlockSpec((o_pad, tk), lambda i, k: (0, k)),
            ]
            out_specs = pl.BlockSpec((tm, o_pad), lambda i, k: (i, 0))
            kernel = _slr_kernel_ksplit
            scratch = [pltpu.VMEM((tm, o_pad), jnp.float32)]
            semantics = ("parallel", "arbitrary")

        return pl.pallas_call(
            kernel,
            out_shape=jax.ShapeDtypeStruct((b_pad, o_pad), out_dtype),
            grid=grid,
            in_specs=in_specs,
            out_specs=out_specs,
            scratch_shapes=scratch,
            compiler_params=pltpu.CompilerParams(
                dimension_semantics=semantics,
                vmem_limit_bytes=vmem_limit),
        )(beff_p, x_bf16, w_bf16)

    if single_buffer_consts:
        try:
            out = run(True)
        except Exception:
            # pipeline_mode / Buffered(1) unsupported in this jax build -> default buffering.
            out = run(False)
    else:
        out = run(False)

    return out[:B, :O]


# ---------------------------------------------------------------------------
# Pure-JAX reference
# ---------------------------------------------------------------------------
def slr_reference(x, weight, bias, *, bf16_inputs=True):
    xf = x.astype(jnp.float32)
    r = jnp.sqrt(jnp.sum(xf[0] ** 2))
    w_f32 = weight.astype(jnp.float32)
    norms = jnp.sqrt(jnp.sum(w_f32 * w_f32, axis=1, keepdims=True))
    wn = w_f32 / jnp.maximum(norms, 1e-12)
    if bf16_inputs:  # mirror the kernel's bf16 MXU inputs
        xf = xf.astype(jnp.bfloat16).astype(jnp.float32)
        wn = wn.astype(jnp.bfloat16).astype(jnp.float32)
    cos = jnp.einsum("bk,ok->bo", xf, wn, precision=jax.lax.Precision.HIGHEST)
    return cos + r * jnp.tanh(bias.astype(jnp.float32))[None, :]


if __name__ == "__main__":
    key = jax.random.PRNGKey(0)

    def make_inputs(k, B, K, O):
        kx, kw, kb = jax.random.split(k, 3)
        x = jax.random.normal(kx, (B, K), dtype=jnp.float32)
        limit = math.sqrt(6.0 / (K + O))                    # xavier_uniform_
        w = jax.random.uniform(kw, (O, K), jnp.float32, minval=-limit, maxval=limit)
        # The module initializes bias to zeros, but it is trainable; use nonzero
        # values so the r*tanh(bias) path is actually exercised.
        b = 0.5 * jax.random.normal(kb, (O,), dtype=jnp.float32)
        return x, w, b

    k1, k2 = jax.random.split(key)

    # Case 1: small shapes -> resident-weight (single MXU op + add) path.
    x, w, b = make_inputs(k1, 8, 32, 16)
    out = jax.block_until_ready(slr_forward(x, w, b))
    assert out.shape == (8, 16)
    assert jnp.allclose(out, slr_reference(x, w, b, bf16_inputs=True),
                        atol=2e-3, rtol=2e-3), "case1 mismatch vs bf16 reference"
    assert jnp.allclose(out, slr_reference(x, w, b, bf16_inputs=False),
                        atol=5e-2, rtol=5e-2), "case1 mismatch vs f32 reference"

    # Case 2: force the K-tiled accumulator path with multiple batch tiles
    # (the configuration used when the weight exceeds the v7x VMEM budget).
    x2, w2, b2 = make_inputs(k2, 24, 384, 40)
    out2 = jax.block_until_ready(slr_forward(x2, w2, b2, tile_m=16, k_tile=128))
    assert out2.shape == (24, 40)
    assert jnp.allclose(out2, slr_reference(x2, w2, b2, bf16_inputs=True),
                        atol=2e-3, rtol=2e-3), "case2 mismatch vs bf16 reference"
    assert jnp.allclose(out2, slr_reference(x2, w2, b2, bf16_inputs=False),
                        atol=5e-2, rtol=5e-2), "case2 mismatch vs f32 reference"

    print("KERNEL_OK")
</pallas_src>

<mosaic_0001>
module attributes {stable_mosaic.version = 11 : i64} {
  func.func @_slr_kernel(%arg0: i32, %arg1: memref<1x128xf32, #tpu.memory_space<vmem>>, %arg2: memref<8x128xbf16, #tpu.memory_space<vmem>>, %arg3: memref<128x128xbf16, #tpu.memory_space<vmem>>, %arg4: memref<8x128xf32, #tpu.memory_space<vmem>>) attributes {dimension_semantics = [#tpu.dimension_semantics<parallel>], iteration_bounds = array<i64: 1>, scalar_prefetch = 0 : i64, scratch_operands = 0 : i64, tpu.core_type = #tpu.core_type<tc>, window_params = [{pipeline_mode = #tpu.pipeline_mode<synchronous>, transform_indices = @transform_0, window_bounds = array<i64: 1, 128>}, {transform_indices = @transform_1, window_bounds = array<i64: 8, 128>}, {pipeline_mode = #tpu.pipeline_mode<synchronous>, transform_indices = @transform_2, window_bounds = array<i64: 128, 128>}, {transform_indices = @transform_3, window_bounds = array<i64: 8, 128>}]} {
    %c0 = arith.constant 0 : index
    %c0_0 = arith.constant 0 : index
    %0 = vector.load %arg2[%c0, %c0_0] : memref<8x128xbf16, #tpu.memory_space<vmem>>, vector<8x128xbf16>
    %c0_1 = arith.constant 0 : index
    %c0_2 = arith.constant 0 : index
    %1 = vector.load %arg3[%c0_1, %c0_2] : memref<128x128xbf16, #tpu.memory_space<vmem>>, vector<128x128xbf16>
    %cst = arith.constant dense<0.000000e+00> : vector<8x128xf32>
    %2 = tpu.matmul %0, %1, %cst {dimension_numbers = #tpu.dot_dimension_numbers<[1], [1], [0], [0], [0, 0, 1, 0], [], []>} : vector<8x128xbf16>, vector<128x128xbf16>, vector<8x128xf32> -> vector<8x128xf32>
    %c0_3 = arith.constant 0 : index
    %c0_4 = arith.constant 0 : index
    %3 = vector.load %arg1[%c0_3, %c0_4] : memref<1x128xf32, #tpu.memory_space<vmem>>, vector<1x128xf32>
    %4 = vector.broadcast %3 : vector<1x128xf32> to vector<8x128xf32>
    %5 = arith.addf %2, %4 : vector<8x128xf32>
    %c0_5 = arith.constant 0 : index
    %c0_6 = arith.constant 0 : index
    %6 = vector.load %arg4[%c0_5, %c0_6] : memref<8x128xf32, #tpu.memory_space<vmem>>, vector<8x128xf32>
    tpu.vector_store %arg4[%c0_5, %c0_6], %5 {strides = array<i32>} : memref<8x128xf32, #tpu.memory_space<vmem>>, vector<8x128xf32>,
    return
  }
  func.func @transform_0(%arg0: i32) -> (i32, i32) {
    %c0_i32 = arith.constant 0 : i32
    %c0_i32_0 = arith.constant 0 : i32
    %c0_i32_1 = arith.constant 0 : i32
    return %c0_i32, %c0_i32_0 : i32, i32
  }
  func.func @transform_1(%arg0: i32) -> (i32, i32) {
    %c0_i32 = arith.constant 0 : i32
    %c0_i32_0 = arith.constant 0 : i32
    return %arg0, %c0_i32 : i32, i32
  }
  func.func @transform_2(%arg0: i32) -> (i32, i32) {
    %c0_i32 = arith.constant 0 : i32
    %c0_i32_0 = arith.constant 0 : i32
    %c0_i32_1 = arith.constant 0 : i32
    return %c0_i32, %c0_i32_0 : i32, i32
  }
  func.func @transform_3(%arg0: i32) -> (i32, i32) {
    %c0_i32 = arith.constant 0 : i32
    %c0_i32_0 = arith.constant 0 : i32
    return %arg0, %c0_i32 : i32, i32
  }
}

module attributes {stable_mosaic.version = 11 : i64} {
  func.func @_slr_kernel(%arg0: i32, %arg1: memref<1x128xf32, #tpu.memory_space<vmem>>, %arg2: memref<8x128xbf16, #tpu.memory_space<vmem>>, %arg3: memref<128x128xbf16, #tpu.memory_space<vmem>>, %arg4: memref<8x128xf32, #tpu.memory_space<vmem>>) attributes {dimension_semantics = [#tpu.dimension_semantics<parallel>], iteration_bounds = array<i64: 1>, scalar_prefetch = 0 : i64, scratch_operands = 0 : i64, tpu.core_type = #tpu.core_type<tc>, window_params = [{pipeline_mode = #tpu.pipeline_mode<synchronous>, transform_indices = @transform_0, window_bounds = array<i64: 1, 128>}, {transform_indices = @transform_1, window_bounds = array<i64: 8, 128>}, {pipeline_mode = #tpu.pipeline_mode<synchronous>, transform_indices = @transform_2, window_bounds = array<i64: 128, 128>}, {transform_indices = @transform_3, window_bounds = array<i64: 8, 128>}]} {
    %c0 = arith.constant 0 : index
    %c0_0 = arith.constant 0 : index
    %0 = vector.load %arg2[%c0, %c0_0] : memref<8x128xbf16, #tpu.memory_space<vmem>>, vector<8x128xbf16>
    %c0_1 = arith.constant 0 : index
    %c0_2 = arith.constant 0 : index
    %1 = vector.load %arg3[%c0_1, %c0_2] : memref<128x128xbf16, #tpu.memory_space<vmem>>, vector<128x128xbf16>
    %cst = arith.constant dense<0.000000e+00> : vector<8x128xf32>
    %2 = tpu.matmul %0, %1, %cst {dimension_numbers = #tpu.dot_dimension_numbers<[1], [1], [0], [0], [0, 0, 1, 0], [], []>} : vector<8x128xbf16>, vector<128x128xbf16>, vector<8x128xf32> -> vector<8x128xf32>
    %c0_3 = arith.constant 0 : index
    %c0_4 = arith.constant 0 : index
    %3 = vector.load %arg1[%c0_3, %c0_4] : memref<1x128xf32, #tpu.memory_space<vmem>>, vector<1x128xf32>
    %4 = vector.broadcast %3 : vector<1x128xf32> to vector<8x128xf32>
    %5 = arith.addf %2, %4 : vector<8x128xf32>
    %c0_5 = arith.constant 0 : index
    %c0_6 = arith.constant 0 : index
    %6 = vector.load %arg4[%c0_5, %c0_6] : memref<8x128xf32, #tpu.memory_space<vmem>>, vector<8x128xf32>
    tpu.vector_store %arg4[%c0_5, %c0_6], %5 {strides = array<i32>} : memref<8x128xf32, #tpu.memory_space<vmem>>, vector<8x128xf32>,
    return
  }
  func.func @transform_0(%arg0: i32) -> (i32, i32) {
    %c0_i32 = arith.constant 0 : i32
    %c0_i32_0 = arith.constant 0 : i32
    %c0_i32_1 = arith.constant 0 : i32
    return %c0_i32, %c0_i32_0 : i32, i32
  }
  func.func @transform_1(%arg0: i32) -> (i32, i32) {
    %c0_i32 = arith.constant 0 : i32
    %c0_i32_0 = arith.constant 0 : i32
    return %arg0, %c0_i32 : i32, i32
  }
  func.func @transform_2(%arg0: i32) -> (i32, i32) {
    %c0_i32 = arith.constant 0 : i32
    %c0_i32_0 = arith.constant 0 : i32
    %c0_i32_1 = arith.constant 0 : i32
    return %c0_i32, %c0_i32_0 : i32, i32
  }
  func.func @transform_3(%arg0: i32) -> (i32, i32) {
    %c0_i32 = arith.constant 0 : i32
    %c0_i32_0 = arith.constant 0 : i32
    return %arg0, %c0_i32 : i32, i32
  }
}

</mosaic_0001>

<llo_original>
// kernel: tpu_custom_call.1
$region0: #{tpu_custom_call.1}
  #allocation0 [shape = 'u32[]', space=smem, size = 0x4, offset = 0x4, fixed_abs, tag = 'smem constant byte address 0x4 - core index']
  #allocation1 [shape = 'u32[144,128]{1,0:T(1,128)}', space=vmem, size = 0x12000, scoped, tag = 'internal scratch']
  %s0 = inlined_call_operand.hbm [shape: f32[1,128], index: 0, kind: input, shape index: {}]
  %s1 = inlined_call_operand.hbm [shape: bf16[8,128], index: 1, kind: input, shape index: {}]
  %s2 = inlined_call_operand.hbm [shape: bf16[128,128], index: 2, kind: input, shape index: {}]
  %s3 = inlined_call_operand.hbm [shape: f32[8,128], index: 3, kind: output, shape index: {}]
  %s4 = sld [smem:[#allocation0]]
  $region34: #{tpu_custom_call.1} parent=0
    _
  %s6 = ssub.s32 1, %s4
  %s7 = scalar_select 0, %s6, %s4
  $region1: #{tpu_custom_call.1} parent=0
    #allocation2 [shape = 'u8[512]{0}', space=vmem, size = 0x400, scoped, tag = 'input window, operand 0, single buffered']
    #allocation3 [shape = 's32[1]{0}', space=sflag, size = 0x4, scoped, tag = 'scoped memory for tpu_custom_call.1']
    #allocation4 [shape = 's32[1]{0}', space=sflag, size = 0x4, scoped, tag = 'scoped memory for tpu_custom_call.1']
    #allocation5 [shape = 'u8[2048]{0}', space=vmem, size = 0x800, scoped, tag = 'input window, operand 1, single buffered']
    #allocation6 [shape = 's32[1]{0}', space=sflag, size = 0x4, scoped, tag = 'scoped memory for tpu_custom_call.1']
    #allocation7 [shape = 'u8[32768]{0}', space=vmem, size = 0x8000, scoped, tag = 'input window, operand 2, single buffered']
    #allocation8 [shape = 'u8[4096]{0}', space=vmem, size = 0x1000, scoped, tag = 'output window, operand 0, single buffered']
    %8 = vsyncpa [#allocation3], 0
    %9 = vsyncpa [#allocation6], 0
    %10 = vsyncpa [#allocation4], 0
    // Predicated region
    $region2: #{tpu_custom_call.1} parent=1 // pred_check
      _
    $region3: #{tpu_custom_call.1} parent=1 // pred_check_branch
      %12 = sbr.rel (0) target = $region5
    $region4: #{tpu_custom_call.1} parent=1 // pred_region
      %s14 = ssub.s32 16, 16
      %15 = vsyncadd [#allocation3], %s14
      %s17 = sshll.u32 [#allocation2], 4
      %s18 = int_to_ptr.vmem [resolvable:$true] %s17
      %20 = dma.hbm_to_vmem [thread:$0]  %s0, 16, %s18, [#allocation3]
    $region5: #{tpu_custom_call.1} parent=1 // pred_fallthru
      _
    // Predicated region
    $region6: #{tpu_custom_call.1} parent=1 // pred_check
      _
    $region7: #{tpu_custom_call.1} parent=1 // pred_check_branch
      %22 = sbr.rel (0) target = $region9
    $region8: #{tpu_custom_call.1} parent=1 // pred_region
      %s24 = ssub.s32 64, 64
      %25 = vsyncadd [#allocation6], %s24
      %s27 = sshll.u32 [#allocation5], 4
      %s28 = int_to_ptr.vmem [resolvable:$true] %s27
      %30 = dma.hbm_to_vmem [thread:$0]  %s1, 64, %s28, [#allocation6]
    $region9: #{tpu_custom_call.1} parent=1 // pred_fallthru
      _
    // Predicated region
    $region10: #{tpu_custom_call.1} parent=1 // pred_check
      _
    $region11: #{tpu_custom_call.1} parent=1 // pred_check_branch
      %32 = sbr.rel (0) target = $region13
    $region12: #{tpu_custom_call.1} parent=1 // pred_region
      %s34 = ssub.s32 1024, 1024
      %35 = vsyncadd [#allocation6], %s34
      %s36 = sshll.u32 [#allocation7], 4
      %s37 = int_to_ptr.vmem [resolvable:$true] %s36
      %42 = dma.hbm_to_vmem [thread:$0]  %s2, 1024, %s37, [#allocation6], 64, 64, 4
    $region13: #{tpu_custom_call.1} parent=1 // pred_fallthru
      _
    // Predicated region
    $region14: #{tpu_custom_call.1} parent=1 // pred_check
      _
    $region15: #{tpu_custom_call.1} parent=1 // pred_check_branch
      %44 = sbr.rel (0) target = $region17
    $region16: #{tpu_custom_call.1} parent=1 // pred_region
      %45 = dma.done [#allocation3], 16
    $region17: #{tpu_custom_call.1} parent=1 // pred_fallthru
      _
    // Predicated region
    $region18: #{tpu_custom_call.1} parent=1 // pred_check
      _
    $region19: #{tpu_custom_call.1} parent=1 // pred_check_branch
      %47 = sbr.rel (0) target = $region21
    $region20: #{tpu_custom_call.1} parent=1 // pred_region
      %48 = dma.done [#allocation6], 64
    $region21: #{tpu_custom_call.1} parent=1 // pred_fallthru
      _
    // Predicated region
    $region22: #{tpu_custom_call.1} parent=1 // pred_check
      _
    $region23: #{tpu_custom_call.1} parent=1 // pred_check_branch
      %50 = sbr.rel (0) target = $region25
    $region24: #{tpu_custom_call.1} parent=1 // pred_region
      %51 = dma.done [#allocation6], 1024
    $region25: #{tpu_custom_call.1} parent=1 // pred_fallthru
      _
    %v53 = vld [vmem:[#allocation5] sm:$0xf]
    %v54 = vld [vmem:[#allocation7] sm:$0xf]
    %v55 = vld [vmem:[#allocation7 + $0x4] sm:$0xf]
    %v56 = vld [vmem:[#allocation7 + $0x8] sm:$0xf]
    %v57 = vld [vmem:[#allocation7 + $0xc] sm:$0xf]
    %v58 = vld [vmem:[#allocation7 + $0x10] sm:$0xf]
    %v59 = vld [vmem:[#allocation7 + $0x14] sm:$0xf]
    %v60 = vld [vmem:[#allocation7 + $0x18] sm:$0xf]
    %v61 = vld [vmem:[#allocation7 + $0x1c] sm:$0xf]
    %v62 = vld [vmem:[#allocation7 + $0x20] sm:$0xf]
    %v63 = vld [vmem:[#allocation7 + $0x24] sm:$0xf]
    %v64 = vld [vmem:[#allocation7 + $0x28] sm:$0xf]
    %v65 = vld [vmem:[#allocation7 + $0x2c] sm:$0xf]
    %v66 = vld [vmem:[#allocation7 + $0x30] sm:$0xf]
    %v67 = vld [vmem:[#allocation7 + $0x34] sm:$0xf]
    %v68 = vld [vmem:[#allocation7 + $0x38] sm:$0xf]
    %v69 = vld [vmem:[#allocation7 + $0x3c] sm:$0xf]
    %v70 = vld [vmem:[#allocation2] sm:$0x1]
    %v72 = vlaneseq
    %v73 = vshrl.u32 %v72, 7
    %v74 = vsub.s32 0, %v73
    %v75 = vrot.slane %v70, %v74
    %v93 = vunpack.c.l.b16 %v54
    %v94 = vunpack.c.l.b16 %v55
    %v95 = vunpack.c.l.b16 %v56
    %v96 = vunpack.c.l.b16 %v57
    %v97 = vunpack.c.l.b16 %v58
    %v98 = vunpack.c.l.b16 %v59
    %v99 = vunpack.c.l.b16 %v60
    %v100 = vunpack.c.l.b16 %v61
    %v101 = vunpack.c.l.b16 %v62
    %v102 = vunpack.c.l.b16 %v63
    %v103 = vunpack.c.l.b16 %v64
    %v104 = vunpack.c.l.b16 %v65
    %v105 = vunpack.c.l.b16 %v66
    %v106 = vunpack.c.l.b16 %v67
    %v107 = vunpack.c.l.b16 %v68
    %v108 = vunpack.c.l.b16 %v69
    %v109 = vpack.c.b16 %v94, %v93
    %v110 = vpack.c.b16 %v96, %v95
    %v111 = vpack.c.b16 %v98, %v97
    %v112 = vpack.c.b16 %v100, %v99
    %v113 = vpack.c.b16 %v102, %v101
    %v114 = vpack.c.b16 %v104, %v103
    %v115 = vpack.c.b16 %v106, %v105
    %v116 = vpack.c.b16 %v108, %v107
    %125 = vmatprep.subr.bf16.mxu0 0
    %126 = vmatpush1.bf16.xpose.msra.mxu0 %v109
    %127 = vmatprep.subr.bf16.mxu0 0
    %128 = vmatpush1.bf16.xpose.msra.mxu0 %v110
    %129 = vmatprep.subr.bf16.mxu0 0
    %130 = vmatpush1.bf16.xpose.msra.mxu0 %v111
    %131 = vmatprep.subr.bf16.mxu0 0
    %132 = vmatpush1.bf16.xpose.msra.mxu0 %v112
    %133 = vmatprep.subr.bf16.mxu0 0
    %134 = vmatpush1.bf16.xpose.msra.mxu0 %v113
    %135 = vmatprep.subr.bf16.mxu0 0
    %136 = vmatpush1.bf16.xpose.msra.mxu0 %v114
    %137 = vmatprep.subr.bf16.mxu0 0
    %138 = vmatpush1.bf16.xpose.msra.mxu0 %v115
    %139 = vmatprep.subr.bf16.mxu0 0
    %140 = vmatpush1.bf16.xpose.msra.mxu0 %v116
    %141 = vmatprep.subr.bf16.mxu0 0
    %142 = vmatpush1.bf16.xpose.msra.mxu0 0
    %143 = vmatprep.subr.bf16.mxu0 0
    %144 = vmatpush1.bf16.xpose.msra.mxu0 0
    %145 = vmatprep.subr.bf16.mxu0 0
    %146 = vmatpush1.bf16.xpose.msra.mxu0 0
    %147 = vmatprep.subr.bf16.mxu0 0
    %148 = vmatpush1.bf16.xpose.msra.mxu0 0
    %149 = vmatprep.subr.bf16.mxu0 0
    %150 = vmatpush1.bf16.xpose.msra.mxu0 0
    %151 = vmatprep.subr.bf16.mxu0 0
    %152 = vmatpush1.bf16.xpose.msra.mxu0 0
    %153 = vmatprep.subr.bf16.mxu0 0
    %154 = vmatpush1.bf16.xpose.msra.mxu0 0
    %155 = vmatprep.subr.bf16.mxu0 0
    %156 = vmatpush1.bf16.xpose.msra.mxu0 0
    %157 = vmatprep.mubr.bf16.mxu0 0
    %158 = vmatmul.mubr.bf16.gmra.mrb[0].mxu0 %v53
    %v159 = vpop.f32.mrb[0].mxu0
    %v160 = vadd.f32 %v75, %v159
    %v161 = vpop.f32.mrb[0].mxu0
    %v162 = vpop.f32.mrb[0].mxu0
    %v163 = vpop.f32.mrb[0].mxu0
    %164 = vdwg.mxu0
    %165 = vst [vmem:[#allocation8] sm:$0xff] %v160
    // Predicated region
    $region26: #{tpu_custom_call.1} parent=1 // pred_check
      _
    $region27: #{tpu_custom_call.1} parent=1 // pred_check_branch
      %167 = sbr.rel (0) target = $region29
    $region28: #{tpu_custom_call.1} parent=1 // pred_region
      %s169 = ssub.s32 128, 128
      %170 = vsyncadd [#allocation4], %s169
      %s172 = sshll.u32 [#allocation8], 4
      %s173 = int_to_ptr.vmem [resolvable:$true] %s172
      %175 = dma.vmem_to_hbm [thread:$0]  %s173, 128, %s3, [#allocation4]
    $region29: #{tpu_custom_call.1} parent=1 // pred_fallthru
      _
    // Predicated region
    $region30: #{tpu_custom_call.1} parent=1 // pred_check
      _
    $region31: #{tpu_custom_call.1} parent=1 // pred_check_branch
      %177 = sbr.rel (0) target = $region33
    $region32: #{tpu_custom_call.1} parent=1 // pred_region
      %178 = dma.done [#allocation4], 128
    $region33: #{tpu_custom_call.1} parent=1 // pred_fallthru
      _
    %179 = vsyncpa [#allocation3], 1
    %180 = vsyncpa [#allocation6], 1
    %181 = vsyncpa [#allocation4], 1

// kernel: tpu_custom_call.1
$region0: #{tpu_custom_call.1}
  #allocation0 [shape = 'u32[]', space=smem, size = 0x4, offset = 0x4, fixed_abs, tag = 'smem constant byte address 0x4 - core index']
  #allocation1 [shape = 'u32[144,128]{1,0:T(1,128)}', space=vmem, size = 0x12000, scoped, tag = 'internal scratch']
  %s0 = inlined_call_operand.hbm [shape: f32[1,128], index: 0, kind: input, shape index: {}]
  %s1 = inlined_call_operand.hbm [shape: bf16[8,128], index: 1, kind: input, shape index: {}]
  %s2 = inlined_call_operand.hbm [shape: bf16[128,128], index: 2, kind: input, shape index: {}]
  %s3 = inlined_call_operand.hbm [shape: f32[8,128], index: 3, kind: output, shape index: {}]
  %s4 = sld [smem:[#allocation0]]
  $region34: #{tpu_custom_call.1} parent=0
    _
  %s6 = ssub.s32 1, %s4
  %s7 = scalar_select 0, %s6, %s4
  $region1: #{tpu_custom_call.1} parent=0
    #allocation2 [shape = 'u8[512]{0}', space=vmem, size = 0x400, scoped, tag = 'input window, operand 0, single buffered']
    #allocation3 [shape = 's32[1]{0}', space=sflag, size = 0x4, scoped, tag = 'scoped memory for tpu_custom_call.1']
    #allocation4 [shape = 's32[1]{0}', space=sflag, size = 0x4, scoped, tag = 'scoped memory for tpu_custom_call.1']
    #allocation5 [shape = 'u8[2048]{0}', space=vmem, size = 0x800, scoped, tag = 'input window, operand 1, single buffered']
    #allocation6 [shape = 's32[1]{0}', space=sflag, size = 0x4, scoped, tag = 'scoped memory for tpu_custom_call.1']
    #allocation7 [shape = 'u8[32768]{0}', space=vmem, size = 0x8000, scoped, tag = 'input window, operand 2, single buffered']
    #allocation8 [shape = 'u8[4096]{0}', space=vmem, size = 0x1000, scoped, tag = 'output window, operand 0, single buffered']
    %8 = vsyncpa [#allocation3], 0
    %9 = vsyncpa [#allocation6], 0
    %10 = vsyncpa [#allocation4], 0
    // Predicated region
    $region2: #{tpu_custom_call.1} parent=1 // pred_check
      _
    $region3: #{tpu_custom_call.1} parent=1 // pred_check_branch
      %12 = sbr.rel (0) target = $region5
    $region4: #{tpu_custom_call.1} parent=1 // pred_region
      %s14 = ssub.s32 16, 16
      %15 = vsyncadd [#allocation3], %s14
      %s17 = sshll.u32 [#allocation2], 4
      %s18 = int_to_ptr.vmem [resolvable:$true] %s17
      %20 = dma.hbm_to_vmem [thread:$0]  %s0, 16, %s18, [#allocation3]
    $region5: #{tpu_custom_call.1} parent=1 // pred_fallthru
      _
    // Predicated region
    $region6: #{tpu_custom_call.1} parent=1 // pred_check
      _
    $region7: #{tpu_custom_call.1} parent=1 // pred_check_branch
      %22 = sbr.rel (0) target = $region9
    $region8: #{tpu_custom_call.1} parent=1 // pred_region
      %s24 = ssub.s32 64, 64
      %25 = vsyncadd [#allocation6], %s24
      %s27 = sshll.u32 [#allocation5], 4
      %s28 = int_to_ptr.vmem [resolvable:$true] %s27
      %30 = dma.hbm_to_vmem [thread:$0]  %s1, 64, %s28, [#allocation6]
    $region9: #{tpu_custom_call.1} parent=1 // pred_fallthru
      _
    // Predicated region
    $region10: #{tpu_custom_call.1} parent=1 // pred_check
      _
    $region11: #{tpu_custom_call.1} parent=1 // pred_check_branch
      %32 = sbr.rel (0) target = $region13
    $region12: #{tpu_custom_call.1} parent=1 // pred_region
      %s34 = ssub.s32 1024, 1024
      %35 = vsyncadd [#allocation6], %s34
      %s36 = sshll.u32 [#allocation7], 4
      %s37 = int_to_ptr.vmem [resolvable:$true] %s36
      %42 = dma.hbm_to_vmem [thread:$0]  %s2, 1024, %s37, [#allocation6], 64, 64, 4
    $region13: #{tpu_custom_call.1} parent=1 // pred_fallthru
      _
    // Predicated region
    $region14: #{tpu_custom_call.1} parent=1 // pred_check
      _
    $region15: #{tpu_custom_call.1} parent=1 // pred_check_branch
      %44 = sbr.rel (0) target = $region17
    $region16: #{tpu_custom_call.1} parent=1 // pred_region
      %45 = dma.done [#allocation3], 16
    $region17: #{tpu_custom_call.1} parent=1 // pred_fallthru
      _
    // Predicated region
    $region18: #{tpu_custom_call.1} parent=1 // pred_check
      _
    $region19: #{tpu_custom_call.1} parent=1 // pred_check_branch
      %47 = sbr.rel (0) target = $region21
    $region20: #{tpu_custom_call.1} parent=1 // pred_region
      %48 = dma.done [#allocation6], 64
    $region21: #{tpu_custom_call.1} parent=1 // pred_fallthru
      _
    // Predicated region
    $region22: #{tpu_custom_call.1} parent=1 // pred_check
      _
    $region23: #{tpu_custom_call.1} parent=1 // pred_check_branch
      %50 = sbr.rel (0) target = $region25
    $region24: #{tpu_custom_call.1} parent=1 // pred_region
      %51 = dma.done [#allocation6], 1024
    $region25: #{tpu_custom_call.1} parent=1 // pred_fallthru
      _
    %v53 = vld [vmem:[#allocation5] sm:$0xf]
    %v54 = vld [vmem:[#allocation7] sm:$0xf]
    %v55 = vld [vmem:[#allocation7 + $0x4] sm:$0xf]
    %v56 = vld [vmem:[#allocation7 + $0x8] sm:$0xf]
    %v57 = vld [vmem:[#allocation7 + $0xc] sm:$0xf]
    %v58 = vld [vmem:[#allocation7 + $0x10] sm:$0xf]
    %v59 = vld [vmem:[#allocation7 + $0x14] sm:$0xf]
    %v60 = vld [vmem:[#allocation7 + $0x18] sm:$0xf]
    %v61 = vld [vmem:[#allocation7 + $0x1c] sm:$0xf]
    %v62 = vld [vmem:[#allocation7 + $0x20] sm:$0xf]
    %v63 = vld [vmem:[#allocation7 + $0x24] sm:$0xf]
    %v64 = vld [vmem:[#allocation7 + $0x28] sm:$0xf]
    %v65 = vld [vmem:[#allocation7 + $0x2c] sm:$0xf]
    %v66 = vld [vmem:[#allocation7 + $0x30] sm:$0xf]
    %v67 = vld [vmem:[#allocation7 + $0x34] sm:$0xf]
    %v68 = vld [vmem:[#allocation7 + $0x38] sm:$0xf]
    %v69 = vld [vmem:[#allocation7 + $0x3c] sm:$0xf]
    %v70 = vld [vmem:[#allocation2] sm:$0x1]
    %v72 = vlaneseq
    %v73 = vshrl.u32 %v72, 7
    %v74 = vsub.s32 0, %v73
    %v75 = vrot.slane %v70, %v74
    %v93 = vunpack.c.l.b16 %v54
    %v94 = vunpack.c.l.b16 %v55
    %v95 = vunpack.c.l.b16 %v56
    %v96 = vunpack.c.l.b16 %v57
    %v97 = vunpack.c.l.b16 %v58
    %v98 = vunpack.c.l.b16 %v59
    %v99 = vunpack.c.l.b16 %v60
    %v100 = vunpack.c.l.b16 %v61
    %v101 = vunpack.c.l.b16 %v62
    %v102 = vunpack.c.l.b16 %v63
    %v103 = vunpack.c.l.b16 %v64
    %v104 = vunpack.c.l.b16 %v65
    %v105 = vunpack.c.l.b16 %v66
    %v106 = vunpack.c.l.b16 %v67
    %v107 = vunpack.c.l.b16 %v68
    %v108 = vunpack.c.l.b16 %v69
    %v109 = vpack.c.b16 %v94, %v93
    %v110 = vpack.c.b16 %v96, %v95
    %v111 = vpack.c.b16 %v98, %v97
    %v112 = vpack.c.b16 %v100, %v99
    %v113 = vpack.c.b16 %v102, %v101
    %v114 = vpack.c.b16 %v104, %v103
    %v115 = vpack.c.b16 %v106, %v105
    %v116 = vpack.c.b16 %v108, %v107
    %125 = vmatprep.subr.bf16.mxu0 0
    %126 = vmatpush1.bf16.xpose.msra.mxu0 %v109
    %127 = vmatprep.subr.bf16.mxu0 0
    %128 = vmatpush1.bf16.xpose.msra.mxu0 %v110
    %129 = vmatprep.subr.bf16.mxu0 0
    %130 = vmatpush1.bf16.xpose.msra.mxu0 %v111
    %131 = vmatprep.subr.bf16.mxu0 0
    %132 = vmatpush1.bf16.xpose.msra.mxu0 %v112
    %133 = vmatprep.subr.bf16.mxu0 0
    %134 = vmatpush1.bf16.xpose.msra.mxu0 %v113
    %135 = vmatprep.subr.bf16.mxu0 0
    %136 = vmatpush1.bf16.xpose.msra.mxu0 %v114
    %137 = vmatprep.subr.bf16.mxu0 0
    %138 = vmatpush1.bf16.xpose.msra.mxu0 %v115
    %139 = vmatprep.subr.bf16.mxu0 0
    %140 = vmatpush1.bf16.xpose.msra.mxu0 %v116
    %141 = vmatprep.subr.bf16.mxu0 0
    %142 = vmatpush1.bf16.xpose.msra.mxu0 0
    %143 = vmatprep.subr.bf16.mxu0 0
    %144 = vmatpush1.bf16.xpose.msra.mxu0 0
    %145 = vmatprep.subr.bf16.mxu0 0
    %146 = vmatpush1.bf16.xpose.msra.mxu0 0
    %147 = vmatprep.subr.bf16.mxu0 0
    %148 = vmatpush1.bf16.xpose.msra.mxu0 0
    %149 = vmatprep.subr.bf16.mxu0 0
    %150 = vmatpush1.bf16.xpose.msra.mxu0 0
    %151 = vmatprep.subr.bf16.mxu0 0
    %152 = vmatpush1.bf16.xpose.msra.mxu0 0
    %153 = vmatprep.subr.bf16.mxu0 0
    %154 = vmatpush1.bf16.xpose.msra.mxu0 0
    %155 = vmatprep.subr.bf16.mxu0 0
    %156 = vmatpush1.bf16.xpose.msra.mxu0 0
    %157 = vmatprep.mubr.bf16.mxu0 0
    %158 = vmatmul.mubr.bf16.gmra.mrb[0].mxu0 %v53
    %v159 = vpop.f32.mrb[0].mxu0
    %v160 = vadd.f32 %v75, %v159
    %v161 = vpop.f32.mrb[0].mxu0
    %v162 = vpop.f32.mrb[0].mxu0
    %v163 = vpop.f32.mrb[0].mxu0
    %164 = vdwg.mxu0
    %165 = vst [vmem:[#allocation8] sm:$0xff] %v160
    // Predicated region
    $region26: #{tpu_custom_call.1} parent=1 // pred_check
      _
    $region27: #{tpu_custom_call.1} parent=1 // pred_check_branch
      %167 = sbr.rel (0) target = $region29
    $region28: #{tpu_custom_call.1} parent=1 // pred_region
      %s169 = ssub.s32 128, 128
      %170 = vsyncadd [#allocation4], %s169
      %s172 = sshll.u32 [#allocation8], 4
      %s173 = int_to_ptr.vmem [resolvable:$true] %s172
      %175 = dma.vmem_to_hbm [thread:$0]  %s173, 128, %s3, [#allocation4]
    $region29: #{tpu_custom_call.1} parent=1 // pred_fallthru
      _
    // Predicated region
    $region30: #{tpu_custom_call.1} parent=1 // pred_check
      _
    $region31: #{tpu_custom_call.1} parent=1 // pred_check_branch
      %177 = sbr.rel (0) target = $region33
    $region32: #{tpu_custom_call.1} parent=1 // pred_region
      %178 = dma.done [#allocation4], 128
    $region33: #{tpu_custom_call.1} parent=1 // pred_fallthru
      _
    %179 = vsyncpa [#allocation3], 1
    %180 = vsyncpa [#allocation6], 1
    %181 = vsyncpa [#allocation4], 1

</llo_original>
